<compile_context>
chip_gen: v7x
topology: tpu7x:2x2x1
jax: 0.10.0
libtpu: 0.0.40
codegen_flags: <defaults>
</compile_context>

<pallas_src>
import functools

import jax
import jax.numpy as jnp
from jax.experimental import pallas as pl
from jax.experimental.pallas import tpu as pltpu


def _vq_kernel(x_ref, e_ref, et_ref, e2_ref,          # inputs
               idx_ref, sse_ref, cnt_ref,             # outputs
               *, n_total, use_bf16_distances):
    i = pl.program_id(0)

    x_t = x_ref[...]          # (D, TN) f32 — flat-input rows on the lane axis
    e = e_ref[...]            # (K, D)  f32 codebook
    e_t = et_ref[...]         # (D, K)  f32 codebook, transposed
    e2 = e2_ref[...]          # (K, 1)  f32 precomputed |e_k|^2 (hoisted)

    k = e.shape[0]
    tn = x_t.shape[1]

    # Distances up to a per-row constant (|x|^2 is argmin-invariant and the
    # loss uses (q - x) directly, so it is never needed):
    #   d_t[k, j] = |e_k|^2 - 2 <x_j, e_k>
    if use_bf16_distances:
        # Ranking-only matmul: bf16 inputs keep the MXU on its native path
        # (v6e / v7x); may flip near-exact ties vs an f32 reference.
        prod = jnp.dot(e.astype(jnp.bfloat16), x_t.astype(jnp.bfloat16),
                       preferred_element_type=jnp.float32)
    else:
        prod = jnp.dot(e, x_t, preferred_element_type=jnp.float32)
    d_t = e2 - 2.0 * prod                                            # (K, TN)

    # argmin over the K codes (sublane axis); first index on ties, matching
    # torch.argmin / jnp.argmin.  Built from two sublane min-reduces.
    d_min = jnp.min(d_t, axis=0, keepdims=True)                      # (1, TN)
    code_ids = jax.lax.broadcasted_iota(jnp.int32, (k, tn), 0)       # (K, TN)
    cand = jnp.where(d_t == d_min, code_ids.astype(jnp.float32), jnp.float32(k))
    idx = jnp.min(cand, axis=0, keepdims=True).astype(jnp.int32)     # (1, TN)
    idx_ref[...] = idx                                               # lane-dense store

    enc_t = (code_ids == idx).astype(jnp.float32)                    # (K, TN) one-hot cols

    # Mask the padded tail columns of the last tile.
    col = jax.lax.broadcasted_iota(jnp.int32, (1, tn), 1) + i * tn
    valid = (col < n_total).astype(jnp.float32)                      # (1, TN)

    # Per-tile code counts: contract the row (lane) axis -> (1, K).
    cnt_ref[...] = jax.lax.dot_general(
        valid, enc_t, (((1,), (1,)), ((), ())),
        preferred_element_type=jnp.float32)

    # Quantized rows (still transposed): q_t[:, j] = embedding[idx_j, :].
    q_t = jnp.dot(e_t, enc_t, preferred_element_type=jnp.float32)    # (D, TN)
    diff = (q_t - x_t) * valid
    sse_ref[...] = jnp.sum(diff * diff, keepdims=True)               # (1, 1)


def _pick_tile_n(requested, n, d, k):
    """Lane-aligned tile size capped by a conservative VMEM budget (v7x-safe)."""
    tn = max(128, (int(requested) // 128) * 128)
    n_rounded = ((n + 127) // 128) * 128
    tn = min(tn, n_rounded)
    # Rough f32 bytes per tile: double-buffered (D,TN) input + (1,TN) index
    # blocks, plus the (K,TN) distance / candidate / one-hot and (D,TN)
    # quantized intermediates.  Stay well under v7x's 64 MiB per-core VMEM.
    budget = 24 * 1024 * 1024
    while tn > 128 and 4 * tn * (4 * d + 3 * k + 4) > budget:
        tn = max(128, (tn // 2 // 128) * 128)
    return tn


def vector_quantizer_ema_forward(x_nchw, embedding, commitment_cost, *,
                                 tile_n=2048, use_bf16_distances=False):
    """Eval-mode forward of VectorQuantizerEMA.

    Args:
      x_nchw:    (B, C, H, W) activations, C == embedding_dim.
      embedding: (K, D) codebook.
    Returns:
      (loss, quantized_nchw, perplexity, encodings) matching the PyTorch module.
    """
    b, c, h, w = x_nchw.shape
    k, d = embedding.shape
    assert c == d, "channel dim must equal embedding_dim"
    n = b * h * w

    x_nhwc = jnp.transpose(x_nchw, (0, 2, 3, 1)).astype(jnp.float32)
    # Transposed flat input (D, N), with N ordered exactly like the flattened
    # NHWC rows, so the big axis is lane-dense inside the kernel.
    flat_t = jnp.transpose(x_nchw, (1, 0, 2, 3)).reshape(d, n).astype(jnp.float32)

    tile_n = _pick_tile_n(tile_n, n, d, k)
    num_tiles = pl.cdiv(n, tile_n)
    n_pad = num_tiles * tile_n
    if n_pad != n:
        flat_t = jnp.pad(flat_t, ((0, 0), (0, n_pad - n)))

    e32 = embedding.astype(jnp.float32)
    e_t = e32.T                                          # (D, K)
    e2 = jnp.sum(e32 * e32, axis=1, keepdims=True)       # (K, 1), hoisted out of the kernel

    kernel = functools.partial(_vq_kernel, n_total=int(n),
                               use_bf16_distances=bool(use_bf16_distances))

    out_shapes = (
        jax.ShapeDtypeStruct((num_tiles, tile_n), jnp.int32),   # nearest-code indices
        jax.ShapeDtypeStruct((num_tiles, 1), jnp.float32),      # per-tile sum sq. error
        jax.ShapeDtypeStruct((num_tiles, k), jnp.float32),      # per-tile code counts
    )

    grid_spec = pltpu.PrefetchScalarGridSpec(
        num_scalar_prefetch=0,
        grid=(num_tiles,),
        in_specs=[
            pl.BlockSpec((d, tile_n), lambda i: (0, i)),   # input rows (transposed)
            pl.BlockSpec((k, d), lambda i: (0, 0)),        # codebook (constant block)
            pl.BlockSpec((d, k), lambda i: (0, 0)),        # codebook^T (constant block)
            pl.BlockSpec((k, 1), lambda i: (0, 0)),        # |e|^2 (constant block)
        ],
        out_specs=[
            pl.BlockSpec((1, tile_n), lambda i: (i, 0)),
            pl.BlockSpec((1, 1), lambda i: (i, 0)),
            pl.BlockSpec((1, k), lambda i: (i, 0)),
        ],
    )

    idx_tiles, sse_tiles, cnt_tiles = pl.pallas_call(
        kernel,
        out_shape=out_shapes,
        grid_spec=grid_spec,
        compiler_params=pltpu.CompilerParams(
            # No state is carried across tiles, so the single grid axis can be
            # sharded across both TensorCores on v7x; harmless on v5e/v6e.
            dimension_semantics=("parallel",),
            vmem_limit_bytes=64 * 1024 * 1024,
        ),
    )(flat_t, e32, e_t, e2)

    # Cheap plain-JAX epilogue finishing the per-tile partials.
    idx_flat = idx_tiles.reshape(-1)[:n]                                 # (N,)
    encodings = jax.nn.one_hot(idx_flat, k, dtype=jnp.float32)           # (N, K)
    # Exact row selection == one-hot @ embedding in the PyTorch module.
    quantized_nhwc = jnp.take(e32, idx_flat, axis=0).reshape(b, h, w, d)

    e_latent_loss = jnp.sum(sse_tiles) / jnp.float32(n * d)
    loss = jnp.float32(commitment_cost) * e_latent_loss

    avg_probs = jnp.sum(cnt_tiles, axis=0) / jnp.float32(n)              # (K,)
    perplexity = jnp.exp(-jnp.sum(avg_probs * jnp.log(avg_probs + 1e-10)))

    # Straight-through estimator (value unchanged in the forward pass).
    quantized_st = x_nhwc + jax.lax.stop_gradient(quantized_nhwc - x_nhwc)
    quantized_nchw = jnp.transpose(quantized_st, (0, 3, 1, 2))

    return loss, quantized_nchw, perplexity, encodings


def _reference_forward(x_nchw, embedding, commitment_cost):
    """Pure-JAX reference mirroring the PyTorch eval forward (f32 throughout)."""
    b, c, h, w = x_nchw.shape
    k, d = embedding.shape
    hi = jax.lax.Precision.HIGHEST
    x_nhwc = jnp.transpose(x_nchw, (0, 2, 3, 1))
    flat = x_nhwc.reshape(-1, d)
    dist = (jnp.sum(flat ** 2, axis=1, keepdims=True)
            + jnp.sum(embedding ** 2, axis=1)
            - 2.0 * jnp.matmul(flat, embedding.T, precision=hi))
    idx = jnp.argmin(dist, axis=1)
    enc = jax.nn.one_hot(idx, k, dtype=jnp.float32)
    q = jnp.matmul(enc, embedding, precision=hi).reshape(b, h, w, d)
    e_latent_loss = jnp.mean((q - x_nhwc) ** 2)
    loss = commitment_cost * e_latent_loss
    q_st = x_nhwc + jax.lax.stop_gradient(q - x_nhwc)
    avg = jnp.mean(enc, axis=0)
    perp = jnp.exp(-jnp.sum(avg * jnp.log(avg + 1e-10)))
    return loss, jnp.transpose(q_st, (0, 3, 1, 2)), perp, enc


if __name__ == "__main__":
    # Module hyper-params (small, consistent with the PyTorch __init__)
    num_embeddings = 16     # K
    embedding_dim = 4       # D (== channel dim C of the NCHW input)
    commitment_cost = 0.25

    key = jax.random.PRNGKey(0)
    k_emb, k_x, k_x2 = jax.random.split(key, 3)

    # nn.Embedding(...).weight.data.normal_()  -> deterministic normal init
    embedding = jax.random.normal(k_emb, (num_embeddings, embedding_dim), jnp.float32)

    # Input: NCHW conv activations
    x = jax.random.normal(k_x, (2, embedding_dim, 16, 16), jnp.float32)

    outs = vector_quantizer_ema_forward(x, embedding, commitment_cost)
    jax.block_until_ready(outs)
    loss, quantized, perplexity, encodings = outs

    r_loss, r_q, r_perp, r_enc = _reference_forward(x, embedding, commitment_cost)
    assert jnp.allclose(loss, r_loss, atol=1e-5), (loss, r_loss)
    assert jnp.allclose(quantized, r_q, atol=1e-5)
    assert jnp.allclose(perplexity, r_perp, atol=1e-4), (perplexity, r_perp)
    assert jnp.allclose(encodings, r_enc)

    # Also exercise the multi-tile + ragged-N (padding / masking) path.
    x_odd = jax.random.normal(k_x2, (2, embedding_dim, 9, 9), jnp.float32)
    outs2 = vector_quantizer_ema_forward(x_odd, embedding, commitment_cost, tile_n=128)
    jax.block_until_ready(outs2)
    loss2, q2, perp2, enc2 = outs2
    r2 = _reference_forward(x_odd, embedding, commitment_cost)
    assert jnp.allclose(loss2, r2[0], atol=1e-5), (loss2, r2[0])
    assert jnp.allclose(q2, r2[1], atol=1e-5)
    assert jnp.allclose(perp2, r2[2], atol=1e-4), (perp2, r2[2])
    assert jnp.allclose(enc2, r2[3])

    print("KERNEL_OK")
</pallas_src>

<mosaic_0001>
module attributes {stable_mosaic.version = 11 : i64} {
  func.func @_vq_kernel(%arg0: i32, %arg1: memref<4x512xf32, #tpu.memory_space<vmem>>, %arg2: memref<16x4xf32, #tpu.memory_space<vmem>>, %arg3: memref<4x16xf32, #tpu.memory_space<vmem>>, %arg4: memref<16x1xf32, #tpu.memory_space<vmem>>, %arg5: memref<1x512xi32, #tpu.memory_space<vmem>>, %arg6: memref<1x1xf32, #tpu.memory_space<vmem>>, %arg7: memref<1x16xf32, #tpu.memory_space<vmem>>) attributes {dimension_semantics = [#tpu.dimension_semantics<parallel>], iteration_bounds = array<i64: 1>, scalar_prefetch = 0 : i64, scratch_operands = 0 : i64, tpu.core_type = #tpu.core_type<tc>, window_params = [{transform_indices = @transform_0, window_bounds = array<i64: 4, 512>}, {pipeline_mode = #tpu.pipeline_mode<synchronous>, transform_indices = @transform_1, window_bounds = array<i64: 16, 4>}, {pipeline_mode = #tpu.pipeline_mode<synchronous>, transform_indices = @transform_2, window_bounds = array<i64: 4, 16>}, {pipeline_mode = #tpu.pipeline_mode<synchronous>, transform_indices = @transform_3, window_bounds = array<i64: 16, 1>}, {transform_indices = @transform_4, window_bounds = array<i64: 1, 512>}, {transform_indices = @transform_5, window_bounds = array<i64: 1, 1>}, {transform_indices = @transform_6, window_bounds = array<i64: 1, 16>}]} {
    %c0 = arith.constant 0 : index
    %c0_0 = arith.constant 0 : index
    %0 = vector.load %arg1[%c0, %c0_0] : memref<4x512xf32, #tpu.memory_space<vmem>>, vector<4x512xf32>
    %c0_1 = arith.constant 0 : index
    %c0_2 = arith.constant 0 : index
    %1 = vector.load %arg2[%c0_1, %c0_2] : memref<16x4xf32, #tpu.memory_space<vmem>>, vector<16x4xf32>
    %c0_3 = arith.constant 0 : index
    %c0_4 = arith.constant 0 : index
    %2 = vector.load %arg3[%c0_3, %c0_4] : memref<4x16xf32, #tpu.memory_space<vmem>>, vector<4x16xf32>
    %c0_5 = arith.constant 0 : index
    %c0_6 = arith.constant 0 : index
    %3 = vector.load %arg4[%c0_5, %c0_6] : memref<16x1xf32, #tpu.memory_space<vmem>>, vector<16x1xf32>
    %cst = arith.constant dense<0.000000e+00> : vector<16x512xf32>
    %4 = tpu.matmul %1, %0, %cst {dimension_numbers = #tpu.dot_dimension_numbers<[1], [0], [0], [1], [0, 0, 1, 1], [], []>} : vector<16x4xf32>, vector<4x512xf32>, vector<16x512xf32> -> vector<16x512xf32>
    %cst_7 = arith.constant 2.000000e+00 : f32
    %5 = vector.broadcast %cst_7 : f32 to vector<16x512xf32>
    %6 = arith.mulf %5, %4 : vector<16x512xf32>
    %7 = vector.broadcast %3 : vector<16x1xf32> to vector<16x512xf32>
    %8 = arith.subf %7, %6 : vector<16x512xf32>
    %cst_8 = arith.constant dense<0x7F800000> : vector<512xf32>
    %9 = vector.multi_reduction <minimumf>, %8, %cst_8 [0] : vector<16x512xf32> to vector<512xf32>
    %10 = vector.shape_cast %9 : vector<512xf32> to vector<1x512xf32>
    %11 = tpu.iota {dimensions = array<i32: 0>} : vector<16x512xi32>
    %12 = vector.broadcast %10 : vector<1x512xf32> to vector<16x512xf32>
    %13 = arith.cmpf oeq, %8, %12 : vector<16x512xf32>
    %14 = arith.sitofp %11 : vector<16x512xi32> to vector<16x512xf32>
    %cst_9 = arith.constant 1.600000e+01 : f32
    %15 = vector.broadcast %cst_9 : f32 to vector<16x512xf32>
    %16 = arith.select %13, %14, %15 : vector<16x512xi1>, vector<16x512xf32>
    %cst_10 = arith.constant dense<0x7F800000> : vector<512xf32>
    %17 = vector.multi_reduction <minimumf>, %16, %cst_10 [0] : vector<16x512xf32> to vector<512xf32>
    %18 = vector.shape_cast %17 : vector<512xf32> to vector<1x512xf32>
    %19 = arith.fptosi %18 : vector<1x512xf32> to vector<1x512xi32>
    %c0_11 = arith.constant 0 : index
    %c0_12 = arith.constant 0 : index
    %20 = vector.load %arg5[%c0_11, %c0_12] : memref<1x512xi32, #tpu.memory_space<vmem>>, vector<1x512xi32>
    tpu.vector_store %arg5[%c0_11, %c0_12], %19 {strides = array<i32>} : memref<1x512xi32, #tpu.memory_space<vmem>>, vector<1x512xi32>,
    %21 = vector.broadcast %19 : vector<1x512xi32> to vector<16x512xi32>
    %22 = arith.cmpi eq, %11, %21 : vector<16x512xi32>
    %23 = arith.extui %22 : vector<16x512xi1> to vector<16x512xi32>
    %24 = arith.sitofp %23 : vector<16x512xi32> to vector<16x512xf32>
    %25 = tpu.iota {dimensions = array<i32: 1>} : vector<1x512xi32>
    %c512_i32 = arith.constant 512 : i32
    %26 = arith.muli %arg0, %c512_i32 : i32
    %27 = vector.broadcast %26 : i32 to vector<1x512xi32>
    %28 = arith.addi %25, %27 : vector<1x512xi32>
    %c512_i32_13 = arith.constant 512 : i32
    %29 = vector.broadcast %c512_i32_13 : i32 to vector<1x512xi32>
    %30 = arith.cmpi slt, %28, %29 : vector<1x512xi32>
    %31 = arith.extui %30 : vector<1x512xi1> to vector<1x512xi32>
    %32 = arith.sitofp %31 : vector<1x512xi32> to vector<1x512xf32>
    %cst_14 = arith.constant dense<0.000000e+00> : vector<1x16xf32>
    %33 = tpu.matmul %32, %24, %cst_14 {dimension_numbers = #tpu.dot_dimension_numbers<[1], [1], [0], [0], [0, 0, 1, 0], [], []>} : vector<1x512xf32>, vector<16x512xf32>, vector<1x16xf32> -> vector<1x16xf32>
    %c0_15 = arith.constant 0 : index
    %c0_16 = arith.constant 0 : index
    %34 = vector.load %arg7[%c0_15, %c0_16] : memref<1x16xf32, #tpu.memory_space<vmem>>, vector<1x16xf32>
    tpu.vector_store %arg7[%c0_15, %c0_16], %33 {strides = array<i32>} : memref<1x16xf32, #tpu.memory_space<vmem>>, vector<1x16xf32>,
    %cst_17 = arith.constant dense<0.000000e+00> : vector<4x512xf32>
    %35 = tpu.matmul %2, %24, %cst_17 {dimension_numbers = #tpu.dot_dimension_numbers<[1], [0], [0], [1], [0, 0, 1, 1], [], []>} : vector<4x16xf32>, vector<16x512xf32>, vector<4x512xf32> -> vector<4x512xf32>
    %36 = arith.subf %35, %0 : vector<4x512xf32>
    %37 = vector.broadcast %32 : vector<1x512xf32> to vector<4x512xf32>
    %38 = arith.mulf %36, %37 : vector<4x512xf32>
    %39 = arith.mulf %38, %38 : vector<4x512xf32>
    %40 = vector.shape_cast %39 : vector<4x512xf32> to vector<1x4x512xf32>
    %cst_18 = arith.constant dense<0.000000e+00> : vector<1xf32>
    %41 = vector.multi_reduction <add>, %40, %cst_18 [1, 2] : vector<1x4x512xf32> to vector<1xf32>
    %42 = vector.shape_cast %41 : vector<1xf32> to vector<1x1x1xf32>
    %43 = vector.extract %42[0, 0, 0] : f32 from vector<1x1x1xf32>
    %44 = vector.broadcast %43 : f32 to vector<1x1xf32>
    %c0_19 = arith.constant 0 : index
    %c0_20 = arith.constant 0 : index
    %45 = vector.load %arg6[%c0_19, %c0_20] : memref<1x1xf32, #tpu.memory_space<vmem>>, vector<1x1xf32>
    tpu.vector_store %arg6[%c0_19, %c0_20], %44 {strides = array<i32>} : memref<1x1xf32, #tpu.memory_space<vmem>>, vector<1x1xf32>,
    return
  }
  func.func @transform_0(%arg0: i32) -> (i32, i32) {
    %c0_i32 = arith.constant 0 : i32
    %c0_i32_0 = arith.constant 0 : i32
    return %c0_i32, %arg0 : i32, i32
  }
  func.func @transform_1(%arg0: i32) -> (i32, i32) {
    %c0_i32 = arith.constant 0 : i32
    %c0_i32_0 = arith.constant 0 : i32
    %c0_i32_1 = arith.constant 0 : i32
    return %c0_i32, %c0_i32_0 : i32, i32
  }
  func.func @transform_2(%arg0: i32) -> (i32, i32) {
    %c0_i32 = arith.constant 0 : i32
    %c0_i32_0 = arith.constant 0 : i32
    %c0_i32_1 = arith.constant 0 : i32
    return %c0_i32, %c0_i32_0 : i32, i32
  }
  func.func @transform_3(%arg0: i32) -> (i32, i32) {
    %c0_i32 = arith.constant 0 : i32
    %c0_i32_0 = arith.constant 0 : i32
    %c0_i32_1 = arith.constant 0 : i32
    return %c0_i32, %c0_i32_0 : i32, i32
  }
  func.func @transform_4(%arg0: i32) -> (i32, i32) {
    %c0_i32 = arith.constant 0 : i32
    %c0_i32_0 = arith.constant 0 : i32
    return %arg0, %c0_i32 : i32, i32
  }
  func.func @transform_5(%arg0: i32) -> (i32, i32) {
    %c0_i32 = arith.constant 0 : i32
    %c0_i32_0 = arith.constant 0 : i32
    return %arg0, %c0_i32 : i32, i32
  }
  func.func @transform_6(%arg0: i32) -> (i32, i32) {
    %c0_i32 = arith.constant 0 : i32
    %c0_i32_0 = arith.constant 0 : i32
    return %arg0, %c0_i32 : i32, i32
  }
}

</mosaic_0001>

<llo_original>
// kernel: tpu_custom_call.1
$region0: #{tpu_custom_call.1}
  #allocation0 [shape = 'u32[]', space=smem, size = 0x4, offset = 0x4, fixed_abs, tag = 'smem constant byte address 0x4 - core index']
  #allocation1 [shape = 'u32[144,128]{1,0:T(1,128)}', space=vmem, size = 0x12000, scoped, tag = 'internal scratch']
  %s0 = inlined_call_operand.hbm [shape: f32[4,512], index: 0, kind: input, shape index: {}]
  %s1 = inlined_call_operand.hbm [shape: f32[16,4], index: 1, kind: input, shape index: {}]
  %s2 = inlined_call_operand.hbm [shape: f32[4,16], index: 2, kind: input, shape index: {}]
  %s3 = inlined_call_operand.hbm [shape: f32[16,1], index: 3, kind: input, shape index: {}]
  %s4 = inlined_call_operand.hbm [shape: s32[1,512], index: 4, kind: output, shape index: {0}]
  %s5 = inlined_call_operand.hbm [shape: f32[1,1], index: 5, kind: output, shape index: {1}]
  %s6 = inlined_call_operand.hbm [shape: f32[1,16], index: 6, kind: output, shape index: {2}]
  %7 = xla_tuple %s4, %s5, %s6
  %s8 = sld [smem:[#allocation0]]
  $region58: #{tpu_custom_call.1} parent=0
    _
  %s10 = ssub.s32 1, %s8
  %s11 = scalar_select 0, %s10, %s8
  $region1: #{tpu_custom_call.1} parent=0
    #allocation2 [shape = 'u8[8192]{0}', space=vmem, size = 0x2000, scoped, tag = 'input window, operand 0, single buffered']
    #allocation3 [shape = 's32[1]{0}', space=sflag, size = 0x4, scoped, tag = 'scoped memory for tpu_custom_call.1']
    #allocation4 [shape = 's32[1]{0}', space=sflag, size = 0x4, scoped, tag = 'scoped memory for tpu_custom_call.1']
    #allocation5 [shape = 'u8[8192]{0}', space=vmem, size = 0x2000, scoped, tag = 'input window, operand 1, single buffered']
    #allocation6 [shape = 's32[1]{0}', space=sflag, size = 0x4, scoped, tag = 'scoped memory for tpu_custom_call.1']
    #allocation7 [shape = 'u8[2048]{0}', space=vmem, size = 0x800, scoped, tag = 'input window, operand 2, single buffered']
    #allocation8 [shape = 'u8[8192]{0}', space=vmem, size = 0x2000, scoped, tag = 'input window, operand 3, single buffered']
    #allocation9 [shape = 's32[1]{0}', space=sflag, size = 0x4, scoped, tag = 'scoped memory for tpu_custom_call.1']
    #allocation10 [shape = 'u8[2048]{0}', space=vmem, size = 0x800, scoped, tag = 'output window, operand 0, single buffered']
    #allocation11 [shape = 'u8[512]{0}', space=vmem, size = 0x400, scoped, tag = 'output window, operand 1, single buffered']
    #allocation12 [shape = 's32[1]{0}', space=sflag, size = 0x4, scoped, tag = 'scoped memory for tpu_custom_call.1']
    #allocation13 [shape = 'u8[512]{0}', space=vmem, size = 0x400, scoped, tag = 'output window, operand 2, single buffered']
    %12 = vsyncpa [#allocation3], 0
    %13 = vsyncpa [#allocation6], 0
    %14 = vsyncpa [#allocation9], 0
    %15 = vsyncpa [#allocation4], 0
    %16 = vsyncpa [#allocation12], 0
    // Predicated region
    $region2: #{tpu_custom_call.1} parent=1 // pred_check
      _
    $region3: #{tpu_custom_call.1} parent=1 // pred_check_branch
      %18 = sbr.rel (0) target = $region5
    $region4: #{tpu_custom_call.1} parent=1 // pred_region
      %s20 = ssub.s32 256, 256
      %21 = vsyncadd [#allocation3], %s20
      %s23 = sshll.u32 [#allocation2], 4
      %s24 = int_to_ptr.vmem [resolvable:$true] %s23
      %26 = dma.hbm_to_vmem [thread:$0]  %s0, 256, %s24, [#allocation3]
    $region5: #{tpu_custom_call.1} parent=1 // pred_fallthru
      _
    // Predicated region
    $region6: #{tpu_custom_call.1} parent=1 // pred_check
      _
    $region7: #{tpu_custom_call.1} parent=1 // pred_check_branch
      %28 = sbr.rel (0) target = $region9
    $region8: #{tpu_custom_call.1} parent=1 // pred_region
      %s30 = ssub.s32 256, 256
      %31 = vsyncadd [#allocation6], %s30
      %s32 = sshll.u32 [#allocation5], 4
      %s33 = int_to_ptr.vmem [resolvable:$true] %s32
      %38 = dma.hbm_to_vmem [thread:$0]  %s1, 256, %s33, [#allocation6], 128, 128, 8
    $region9: #{tpu_custom_call.1} parent=1 // pred_fallthru
      _
    // Predicated region
    $region10: #{tpu_custom_call.1} parent=1 // pred_check
      _
    $region11: #{tpu_custom_call.1} parent=1 // pred_check_branch
      %40 = sbr.rel (0) target = $region13
    $region12: #{tpu_custom_call.1} parent=1 // pred_region
      %s42 = ssub.s32 64, 64
      %43 = vsyncadd [#allocation6], %s42
      %s45 = sshll.u32 [#allocation7], 4
      %s46 = int_to_ptr.vmem [resolvable:$true] %s45
      %48 = dma.hbm_to_vmem [thread:$0]  %s2, 64, %s46, [#allocation6]
    $region13: #{tpu_custom_call.1} parent=1 // pred_fallthru
      _
    // Predicated region
    $region14: #{tpu_custom_call.1} parent=1 // pred_check
      _
    $region15: #{tpu_custom_call.1} parent=1 // pred_check_branch
      %50 = sbr.rel (0) target = $region17
    $region16: #{tpu_custom_call.1} parent=1 // pred_region
      %s52 = ssub.s32 256, 256
      %53 = vsyncadd [#allocation9], %s52
      %s54 = sshll.u32 [#allocation8], 4
      %s55 = int_to_ptr.vmem [resolvable:$true] %s54
      %60 = dma.hbm_to_vmem [thread:$0]  %s3, 256, %s55, [#allocation9], 128, 128, 8
    $region17: #{tpu_custom_call.1} parent=1 // pred_fallthru
      _
    // Predicated region
    $region18: #{tpu_custom_call.1} parent=1 // pred_check
      _
    $region19: #{tpu_custom_call.1} parent=1 // pred_check_branch
      %62 = sbr.rel (0) target = $region21
    $region20: #{tpu_custom_call.1} parent=1 // pred_region
      %63 = dma.done [#allocation3], 256
    $region21: #{tpu_custom_call.1} parent=1 // pred_fallthru
      _
    // Predicated region
    $region22: #{tpu_custom_call.1} parent=1 // pred_check
      _
    $region23: #{tpu_custom_call.1} parent=1 // pred_check_branch
      %65 = sbr.rel (0) target = $region25
    $region24: #{tpu_custom_call.1} parent=1 // pred_region
      %66 = dma.done [#allocation6], 256
    $region25: #{tpu_custom_call.1} parent=1 // pred_fallthru
      _
    // Predicated region
    $region26: #{tpu_custom_call.1} parent=1 // pred_check
      _
    $region27: #{tpu_custom_call.1} parent=1 // pred_check_branch
      %68 = sbr.rel (0) target = $region29
    $region28: #{tpu_custom_call.1} parent=1 // pred_region
      %69 = dma.done [#allocation6], 64
    $region29: #{tpu_custom_call.1} parent=1 // pred_fallthru
      _
    // Predicated region
    $region30: #{tpu_custom_call.1} parent=1 // pred_check
      _
    $region31: #{tpu_custom_call.1} parent=1 // pred_check_branch
      %71 = sbr.rel (0) target = $region33
    $region32: #{tpu_custom_call.1} parent=1 // pred_region
      %72 = dma.done [#allocation9], 256
    $region33: #{tpu_custom_call.1} parent=1 // pred_fallthru
      _
    %v73 = vld [vmem:[#allocation2] sm:$0xff]
    %v74 = vld [vmem:[#allocation2 + $0x8] sm:$0xff]
    %v75 = vld [vmem:[#allocation5] sm:$0xff]
    %v76 = vld [vmem:[#allocation5 + $0x8] sm:$0xff]
    %v77 = vld [vmem:[#allocation7] sm:$0xf]
    %v78 = vld [vmem:[#allocation8] sm:$0xff]
    %v79 = vld [vmem:[#allocation8 + $0x8] sm:$0xff]
    %v82 = vcombine.high %v73, %v73
    %v83 = vcombine.high %v74, %v74
    %vm84 = vcmask 31744
    %v86 = vsel %vm84, %v75, 0
    %v89 = vsel %vm84, %v76, 0
    %vm91 = vcmask 1043456
    %v92 = vsel %vm91, %v73, 0
    %v94 = vsel %vm91, %v82, 0
    %v96 = vsel %vm91, %v74, 0
    %v98 = vsel %vm91, %v83, 0
    %100 = vmatprep.subr.mxu0 %v94
    %101 = vmatpush1.msra.mxu0 %v92
    %102 = vmatprep.subr.mxu0 0.0
    %103 = vmatpush1.msra.mxu0 0.0
    %104 = vmatprep.subr.mxu0 0.0
    %105 = vmatpush1.msra.mxu0 0.0
    %106 = vmatprep.subr.mxu0 0.0
    %107 = vmatpush1.msra.mxu0 0.0
    %108 = vmatprep.subr.mxu0 0.0
    %109 = vmatpush1.msra.mxu0 0.0
    %110 = vmatprep.subr.mxu0 0.0
    %111 = vmatpush1.msra.mxu0 0.0
    %112 = vmatprep.subr.mxu0 0.0
    %113 = vmatpush1.msra.mxu0 0.0
    %114 = vmatprep.subr.mxu0 0.0
    %115 = vmatpush1.msra.mxu0 0.0
    %116 = vmatprep.subr.mxu0 0.0
    %117 = vmatpush1.msra.mxu0 0.0
    %118 = vmatprep.subr.mxu0 0.0
    %119 = vmatpush1.msra.mxu0 0.0
    %120 = vmatprep.subr.mxu0 0.0
    %121 = vmatpush1.msra.mxu0 0.0
    %122 = vmatprep.subr.mxu0 0.0
    %123 = vmatpush1.msra.mxu0 0.0
    %124 = vmatprep.subr.mxu0 0.0
    %125 = vmatpush1.msra.mxu0 0.0
    %126 = vmatprep.subr.mxu0 0.0
    %127 = vmatpush1.msra.mxu0 0.0
    %128 = vmatprep.subr.mxu0 0.0
    %129 = vmatpush1.msra.mxu0 0.0
    %130 = vmatprep.subr.mxu0 0.0
    %131 = vmatpush1.msra.mxu0 0.0
    %132 = vmatprep.subr.mxu0 0.0
    %133 = vmatpush1.msra.mxu0 0.0
    %134 = vmatprep.subr.mxu0 0.0
    %135 = vmatpush1.msra.mxu0 0.0
    %136 = vmatprep.subr.mxu0 0.0
    %137 = vmatpush1.msra.mxu0 0.0
    %138 = vmatprep.subr.mxu0 0.0
    %139 = vmatpush1.msra.mxu0 0.0
    %140 = vmatprep.subr.mxu0 0.0
    %141 = vmatpush1.msra.mxu0 0.0
    %142 = vmatprep.subr.mxu0 0.0
    %143 = vmatpush1.msra.mxu0 0.0
    %144 = vmatprep.subr.mxu0 0.0
    %145 = vmatpush1.msra.mxu0 0.0
    %146 = vmatprep.subr.mxu0 0.0
    %147 = vmatpush1.msra.mxu0 0.0
    %148 = vmatprep.subr.mxu0 0.0
    %149 = vmatpush1.msra.mxu0 0.0
    %150 = vmatprep.subr.mxu0 0.0
    %151 = vmatpush1.msra.mxu0 0.0
    %152 = vmatprep.subr.mxu0 0.0
    %153 = vmatpush1.msra.mxu0 0.0
    %154 = vmatprep.subr.mxu0 0.0
    %155 = vmatpush1.msra.mxu0 0.0
    %156 = vmatprep.subr.mxu0 0.0
    %157 = vmatpush1.msra.mxu0 0.0
    %158 = vmatprep.subr.mxu0 0.0
    %159 = vmatpush1.msra.mxu0 0.0
    %160 = vmatprep.subr.mxu0 0.0
    %161 = vmatpush1.msra.mxu0 0.0
    %162 = vmatprep.subr.mxu0 0.0
    %163 = vmatpush1.msra.mxu0 0.0
    %164 = vmatprep.mubr.f32.mxu0 0.0
    %165 = vmatmul.mubr.f32.gmra.mrb[0].mxu0 %v86
    %v166 = vpop.f32.mrb[0].mxu0
    %v167 = vadd.f32 0.0, %v166
    %v168 = vpop.f32.mrb[0].mxu0
    %v169 = vadd.f32 0.0, %v168
    %170 = vmatprep.mubr.f32.mxu0 0.0
    %171 = vmatmul.mubr.f32.gmra.mrb[0].mxu0 %v89
    %v172 = vpop.f32.mrb[0].mxu0
    %v173 = vadd.f32 0.0, %v172
    %v174 = vpop.f32.mrb[0].mxu0
    %v175 = vadd.f32 0.0, %v174
    %176 = vdwg.mxu0
    %177 = vmatprep.subr.mxu0 %v98
    %178 = vmatpush1.msra.mxu0 %v96
    %179 = vmatprep.subr.mxu0 0.0
    %180 = vmatpush1.msra.mxu0 0.0
    %181 = vmatprep.subr.mxu0 0.0
    %182 = vmatpush1.msra.mxu0 0.0
    %183 = vmatprep.subr.mxu0 0.0
    %184 = vmatpush1.msra.mxu0 0.0
    %185 = vmatprep.subr.mxu0 0.0
    %186 = vmatpush1.msra.mxu0 0.0
    %187 = vmatprep.subr.mxu0 0.0
    %188 = vmatpush1.msra.mxu0 0.0
    %189 = vmatprep.subr.mxu0 0.0
    %190 = vmatpush1.msra.mxu0 0.0
    %191 = vmatprep.subr.mxu0 0.0
    %192 = vmatpush1.msra.mxu0 0.0
    %193 = vmatprep.subr.mxu0 0.0
    %194 = vmatpush1.msra.mxu0 0.0
    %195 = vmatprep.subr.mxu0 0.0
    %196 = vmatpush1.msra.mxu0 0.0
    %197 = vmatprep.subr.mxu0 0.0
    %198 = vmatpush1.msra.mxu0 0.0
    %199 = vmatprep.subr.mxu0 0.0
    %200 = vmatpush1.msra.mxu0 0.0
    %201 = vmatprep.subr.mxu0 0.0
    %202 = vmatpush1.msra.mxu0 0.0
    %203 = vmatprep.subr.mxu0 0.0
    %204 = vmatpush1.msra.mxu0 0.0
    %205 = vmatprep.subr.mxu0 0.0
    %206 = vmatpush1.msra.mxu0 0.0
    %207 = vmatprep.subr.mxu0 0.0
    %208 = vmatpush1.msra.mxu0 0.0
    %209 = vmatprep.subr.mxu0 0.0
    %210 = vmatpush1.msra.mxu0 0.0
    %211 = vmatprep.subr.mxu0 0.0
    %212 = vmatpush1.msra.mxu0 0.0
    %213 = vmatprep.subr.mxu0 0.0
    %214 = vmatpush1.msra.mxu0 0.0
    %215 = vmatprep.subr.mxu0 0.0
    %216 = vmatpush1.msra.mxu0 0.0
    %217 = vmatprep.subr.mxu0 0.0
    %218 = vmatpush1.msra.mxu0 0.0
    %219 = vmatprep.subr.mxu0 0.0
    %220 = vmatpush1.msra.mxu0 0.0
    %221 = vmatprep.subr.mxu0 0.0
    %222 = vmatpush1.msra.mxu0 0.0
    %223 = vmatprep.subr.mxu0 0.0
    %224 = vmatpush1.msra.mxu0 0.0
    %225 = vmatprep.subr.mxu0 0.0
    %226 = vmatpush1.msra.mxu0 0.0
    %227 = vmatprep.subr.mxu0 0.0
    %228 = vmatpush1.msra.mxu0 0.0
    %229 = vmatprep.subr.mxu0 0.0
    %230 = vmatpush1.msra.mxu0 0.0
    %231 = vmatprep.subr.mxu0 0.0
    %232 = vmatpush1.msra.mxu0 0.0
    %233 = vmatprep.subr.mxu0 0.0
    %234 = vmatpush1.msra.mxu0 0.0
    %235 = vmatprep.subr.mxu0 0.0
    %236 = vmatpush1.msra.mxu0 0.0
    %237 = vmatprep.subr.mxu0 0.0
    %238 = vmatpush1.msra.mxu0 0.0
    %239 = vmatprep.subr.mxu0 0.0
    %240 = vmatpush1.msra.mxu0 0.0
    %241 = vmatprep.mubr.f32.mxu0 0.0
    %242 = vmatmul.mubr.f32.gmra.mrb[0].mxu0 %v86
    %v243 = vpop.f32.mrb[0].mxu0
    %v244 = vadd.f32 0.0, %v243
    %v245 = vpop.f32.mrb[0].mxu0
    %v246 = vadd.f32 0.0, %v245
    %247 = vmatprep.mubr.f32.mxu0 0.0
    %248 = vmatmul.mubr.f32.gmra.mrb[0].mxu0 %v89
    %v249 = vpop.f32.mrb[0].mxu0
    %v250 = vadd.f32 0.0, %v249
    %v251 = vpop.f32.mrb[0].mxu0
    %v252 = vadd.f32 0.0, %v251
    %253 = vdwg.mxu0
    %v254 = vmul.f32 %v167, 2.0
    %v255 = vmul.f32 %v169, 2.0
    %v256 = vmul.f32 %v244, 2.0
    %v257 = vmul.f32 %v246, 2.0
    %v258 = vmul.f32 %v173, 2.0
    %v259 = vmul.f32 %v175, 2.0
    %v260 = vmul.f32 %v250, 2.0
    %v261 = vmul.f32 %v252, 2.0
    %263 = vset.pattern.permute.xlu0 0
    %264 = vperm.xlu0 %263, %v78
    %v265 = vpop.permute.xlu0 %264
    %268 = vset.pattern.permute.xlu0 0
    %269 = vperm.xlu0 %268, %v79
    %v270 = vpop.permute.xlu0 %269
    %v272 = vsub.f32 %v265, %v254
    %v273 = vsub.f32 %v265, %v255
    %v274 = vsub.f32 %v265, %v256
    %v275 = vsub.f32 %v265, %v257
    %v276 = vsub.f32 %v270, %v258
    %v277 = vsub.f32 %v270, %v259
    %v278 = vsub.f32 %v270, %v260
    %v279 = vsub.f32 %v270, %v261
    %v280 = vmin.f32 %v272, %v276
    %v281 = vrot.slane %v280, 4
    %v282 = vmin.f32 %v280, %v281
    %v283 = vrot.slane %v282, 2
    %v284 = vmin.f32 %v282, %v283
    %v285 = vrot.slane %v284, 1
    %v286 = vmin.f32 %v284, %v285
    %v287 = vmin.f32 %v273, %v277
    %v288 = vrot.slane %v287, 4
    %v289 = vmin.f32 %v287, %v288
    %v290 = vrot.slane %v289, 2
    %v291 = vmin.f32 %v289, %v290
    %v292 = vrot.slane %v291, 1
    %v293 = vmin.f32 %v291, %v292
    %v294 = vmin.f32 %v274, %v278
    %v295 = vrot.slane %v294, 4
    %v296 = vmin.f32 %v294, %v295
    %v297 = vrot.slane %v296, 2
    %v298 = vmin.f32 %v296, %v297
    %v299 = vrot.slane %v298, 1
    %v300 = vmin.f32 %v298, %v299
    %v301 = vmin.f32 %v275, %v279
    %v302 = vrot.slane %v301, 4
    %v303 = vmin.f32 %v301, %v302
    %v304 = vrot.slane %v303, 2
    %v305 = vmin.f32 %v303, %v304
    %v306 = vrot.slane %v305, 1
    %v307 = vmin.f32 %v305, %v306
    %v308 = vlaneseq
    %v309 = vshrl.u32 %v308, 7
    %v310 = vadd.s32 %v309, 8
    %vm311 = vcmp.eq.f32.partialorder %v272, %v286
    %vm312 = vcmp.eq.f32.partialorder %v273, %v293
    %vm313 = vcmp.eq.f32.partialorder %v274, %v300
    %vm314 = vcmp.eq.f32.partialorder %v275, %v307
    %vm315 = vcmp.eq.f32.partialorder %v276, %v286
    %vm316 = vcmp.eq.f32.partialorder %v277, %v293
    %vm317 = vcmp.eq.f32.partialorder %v278, %v300
    %vm318 = vcmp.eq.f32.partialorder %v279, %v307
    %v319 = vcvt.s32.f32 %v309
    %v320 = vcvt.s32.f32 %v310
    %v321 = vsel %vm311, %v319, 16.0
    %v322 = vsel %vm312, %v319, 16.0
    %v323 = vsel %vm313, %v319, 16.0
    %v324 = vsel %vm314, %v319, 16.0
    %v325 = vsel %vm315, %v320, 16.0
    %v326 = vsel %vm316, %v320, 16.0
    %v327 = vsel %vm317, %v320, 16.0
    %v328 = vsel %vm318, %v320, 16.0
    %v329 = vmin.f32 %v321, %v325
    %v330 = vrot.slane %v329, 4
    %v331 = vmin.f32 %v329, %v330
    %v332 = vrot.slane %v331, 2
    %v333 = vmin.f32 %v331, %v332
    %v334 = vrot.slane %v333, 1
    %v335 = vmin.f32 %v333, %v334
    %v336 = vmin.f32 %v322, %v326
    %v337 = vrot.slane %v336, 4
    %v338 = vmin.f32 %v336, %v337
    %v339 = vrot.slane %v338, 2
    %v340 = vmin.f32 %v338, %v339
    %v341 = vrot.slane %v340, 1
    %v342 = vmin.f32 %v340, %v341
    %v343 = vmin.f32 %v323, %v327
    %v344 = vrot.slane %v343, 4
    %v345 = vmin.f32 %v343, %v344
    %v346 = vrot.slane %v345, 2
    %v347 = vmin.f32 %v345, %v346
    %v348 = vrot.slane %v347, 1
    %v349 = vmin.f32 %v347, %v348
    %v350 = vmin.f32 %v324, %v328
    %v351 = vrot.slane %v350, 4
    %v352 = vmin.f32 %v350, %v351
    %v353 = vrot.slane %v352, 2
    %v354 = vmin.f32 %v352, %v353
    %v355 = vrot.slane %v354, 1
    %v356 = vmin.f32 %v354, %v355
    %v357 = vcvt.f32.s32.to.zero.pseudo %v335
    %v358 = vcvt.f32.s32.to.zero.pseudo %v342
    %v359 = vcvt.f32.s32.to.zero.pseudo %v349
    %v360 = vcvt.f32.s32.to.zero.pseudo %v356
    %v361 = vcombine.low %v357, %v358
    %v362 = vcombine.low %v359, %v360
    %v364 = vunpack.c.l.s4 1966171168
    %v365 = vunpack.c.0.s8 %v364
    %v366 = vlaneseq
    %v367 = vshrl.u32 %v366, 7
    %v368 = vsub.s32 %v365, %v367
    %v369 = vrot.slane %v361, %v368
    %v371 = vunpack.c.l.s4 1966171168
    %v372 = vunpack.c.0.s8 %v371
    %v373 = vlaneseq
    %v374 = vshrl.u32 %v373, 7
    %v375 = vsub.s32 %v372, %v374
    %v376 = vrot.slane %v362, %v375
    %v377 = vcombine.low %v369, %v376
    %v379 = vunpack.c.l.s4 1966171168
    %v380 = vunpack.c.0.s8 %v379
    %v381 = vlaneseq
    %v382 = vshrl.u32 %v381, 7
    %v383 = vsub.s32 %v380, %v382
    %v384 = vrot.slane %v377, %v383
    %v385 = vlaneseq
    %vm386 = vcmp.ge.s32.totalorder %v385, 0
    %vm387 = vcmp.lt.s32.totalorder %v385, 512
    %vm388 = vmand %vm386, %vm387
    %389 = vst.msk [vmem:[#allocation10] sm:$0xf] %vm388, %v384
    %vm390 = vcmp.eq.s32.totalorder %v309, %v357
    %vm391 = vcmp.eq.s32.totalorder %v309, %v358
    %vm392 = vcmp.eq.s32.totalorder %v309, %v359
    %vm393 = vcmp.eq.s32.totalorder %v309, %v360
    %vm394 = vcmp.eq.s32.totalorder %v310, %v357
    %vm395 = vcmp.eq.s32.totalorder %v310, %v358
    %vm396 = vcmp.eq.s32.totalorder %v310, %v359
    %vm397 = vcmp.eq.s32.totalorder %v310, %v360
    %v398 = vsel %vm390, 1, 0
    %v399 = vsel %vm391, 1, 0
    %v400 = vsel %vm392, 1, 0
    %v401 = vsel %vm393, 1, 0
    %v402 = vsel %vm394, 1, 0
    %v403 = vsel %vm395, 1, 0
    %v404 = vsel %vm396, 1, 0
    %v405 = vsel %vm397, 1, 0
    %v406 = vcvt.s32.f32 %v398
    %v407 = vcvt.s32.f32 %v399
    %v408 = vcvt.s32.f32 %v400
    %v409 = vcvt.s32.f32 %v401
    %v410 = vcvt.s32.f32 %v402
    %v411 = vcvt.s32.f32 %v403
    %v412 = vcvt.s32.f32 %v404
    %v413 = vcvt.s32.f32 %v405
    %v414 = vlaneseq
    %v415 = vand.u32 %v414, 127
    %v416 = vadd.s32 %v415, 128
    %v417 = vadd.s32 %v415, 256
    %v418 = vadd.s32 %v415, 384
    %s419 = smul.u32 0, 512
    %v420 = vstv %s419
    %v421 = vadd.s32 %v415, %v420
    %v422 = vadd.s32 %v416, %v420
    %v423 = vadd.s32 %v417, %v420
    %v424 = vadd.s32 %v418, %v420
    %vm425 = vcmp.lt.s32.totalorder %v421, 512
    %vm426 = vcmp.lt.s32.totalorder %v422, 512
    %vm427 = vcmp.lt.s32.totalorder %v423, 512
    %vm428 = vcmp.lt.s32.totalorder %v424, 512
    %v429 = vsel %vm425, 1, 0
    %v430 = vsel %vm426, 1, 0
    %v431 = vsel %vm427, 1, 0
    %v432 = vsel %vm428, 1, 0
    %v433 = vcvt.s32.f32 %v429
    %v434 = vcvt.s32.f32 %v430
    %v435 = vcvt.s32.f32 %v431
    %v436 = vcvt.s32.f32 %v432
    %437 = vmatprep.subr.mxu0 %v407
    %438 = vmatpush1.xpose.msra.mxu0 %v406
    %439 = vmatprep.subr.mxu0 %v411
    %440 = vmatpush1.xpose.msra.mxu0 %v410
    %441 = vmatprep.subr.mxu0 0.0
    %442 = vmatpush1.xpose.msra.mxu0 0.0
    %443 = vmatprep.subr.mxu0 0.0
    %444 = vmatpush1.xpose.msra.mxu0 0.0
    %445 = vmatprep.subr.mxu0 0.0
    %446 = vmatpush1.xpose.msra.mxu0 0.0
    %447 = vmatprep.subr.mxu0 0.0
    %448 = vmatpush1.xpose.msra.mxu0 0.0
    %449 = vmatprep.subr.mxu0 0.0
    %450 = vmatpush1.xpose.msra.mxu0 0.0
    %451 = vmatprep.subr.mxu0 0.0
    %452 = vmatpush1.xpose.msra.mxu0 0.0
    %453 = vmatprep.subr.mxu0 0.0
    %454 = vmatpush1.xpose.msra.mxu0 0.0
    %455 = vmatprep.subr.mxu0 0.0
    %456 = vmatpush1.xpose.msra.mxu0 0.0
    %457 = vmatprep.subr.mxu0 0.0
    %458 = vmatpush1.xpose.msra.mxu0 0.0
    %459 = vmatprep.subr.mxu0 0.0
    %460 = vmatpush1.xpose.msra.mxu0 0.0
    %461 = vmatprep.subr.mxu0 0.0
    %462 = vmatpush1.xpose.msra.mxu0 0.0
    %463 = vmatprep.subr.mxu0 0.0
    %464 = vmatpush1.xpose.msra.mxu0 0.0
    %465 = vmatprep.subr.mxu0 0.0
    %466 = vmatpush1.xpose.msra.mxu0 0.0
    %467 = vmatprep.subr.mxu0 0.0
    %468 = vmatpush1.xpose.msra.mxu0 0.0
    %469 = vmatprep.subr.mxu0 0.0
    %470 = vmatpush1.xpose.msra.mxu0 0.0
    %471 = vmatprep.subr.mxu0 0.0
    %472 = vmatpush1.xpose.msra.mxu0 0.0
    %473 = vmatprep.subr.mxu0 0.0
    %474 = vmatpush1.xpose.msra.mxu0 0.0
    %475 = vmatprep.subr.mxu0 0.0
    %476 = vmatpush1.xpose.msra.mxu0 0.0
    %477 = vmatprep.subr.mxu0 0.0
    %478 = vmatpush1.xpose.msra.mxu0 0.0
    %479 = vmatprep.subr.mxu0 0.0
    %480 = vmatpush1.xpose.msra.mxu0 0.0
    %481 = vmatprep.subr.mxu0 0.0
    %482 = vmatpush1.xpose.msra.mxu0 0.0
    %483 = vmatprep.subr.mxu0 0.0
    %484 = vmatpush1.xpose.msra.mxu0 0.0
    %485 = vmatprep.subr.mxu0 0.0
    %486 = vmatpush1.xpose.msra.mxu0 0.0
    %487 = vmatprep.subr.mxu0 0.0
    %488 = vmatpush1.xpose.msra.mxu0 0.0
    %489 = vmatprep.subr.mxu0 0.0
    %490 = vmatpush1.xpose.msra.mxu0 0.0
    %491 = vmatprep.subr.mxu0 0.0
    %492 = vmatpush1.xpose.msra.mxu0 0.0
    %493 = vmatprep.subr.mxu0 0.0
    %494 = vmatpush1.xpose.msra.mxu0 0.0
    %495 = vmatprep.subr.mxu0 0.0
    %496 = vmatpush1.xpose.msra.mxu0 0.0
    %497 = vmatprep.subr.mxu0 0.0
    %498 = vmatpush1.xpose.msra.mxu0 0.0
    %499 = vmatprep.subr.mxu0 0.0
    %500 = vmatpush1.xpose.msra.mxu0 0.0
    %501 = vmatprep.mubr.f32.mxu0 %v434
    %502 = vmatmul.mubr.f32.gmra.mrb[0].mxu0 %v433
    %v503 = vpop.f32.mrb[0].mxu0
    %v504 = vadd.f32 0.0, %v503
    %v505 = vpop.f32.mrb[0].mxu0
    %506 = vdwg.mxu0
    %507 = vmatprep.subr.mxu0 %v409
    %508 = vmatpush1.xpose.msra.mxu0 %v408
    %509 = vmatprep.subr.mxu0 %v413
    %510 = vmatpush1.xpose.msra.mxu0 %v412
    %511 = vmatprep.subr.mxu0 0.0
    %512 = vmatpush1.xpose.msra.mxu0 0.0
    %513 = vmatprep.subr.mxu0 0.0
    %514 = vmatpush1.xpose.msra.mxu0 0.0
    %515 = vmatprep.subr.mxu0 0.0
    %516 = vmatpush1.xpose.msra.mxu0 0.0
    %517 = vmatprep.subr.mxu0 0.0
    %518 = vmatpush1.xpose.msra.mxu0 0.0
    %519 = vmatprep.subr.mxu0 0.0
    %520 = vmatpush1.xpose.msra.mxu0 0.0
    %521 = vmatprep.subr.mxu0 0.0
    %522 = vmatpush1.xpose.msra.mxu0 0.0
    %523 = vmatprep.subr.mxu0 0.0
    %524 = vmatpush1.xpose.msra.mxu0 0.0
    %525 = vmatprep.subr.mxu0 0.0
    %526 = vmatpush1.xpose.msra.mxu0 0.0
    %527 = vmatprep.subr.mxu0 0.0
    %528 = vmatpush1.xpose.msra.mxu0 0.0
    %529 = vmatprep.subr.mxu0 0.0
    %530 = vmatpush1.xpose.msra.mxu0 0.0
    %531 = vmatprep.subr.mxu0 0.0
    %532 = vmatpush1.xpose.msra.mxu0 0.0
    %533 = vmatprep.subr.mxu0 0.0
    %534 = vmatpush1.xpose.msra.mxu0 0.0
    %535 = vmatprep.subr.mxu0 0.0
    %536 = vmatpush1.xpose.msra.mxu0 0.0
    %537 = vmatprep.subr.mxu0 0.0
    %538 = vmatpush1.xpose.msra.mxu0 0.0
    %539 = vmatprep.subr.mxu0 0.0
    %540 = vmatpush1.xpose.msra.mxu0 0.0
    %541 = vmatprep.subr.mxu0 0.0
    %542 = vmatpush1.xpose.msra.mxu0 0.0
    %543 = vmatprep.subr.mxu0 0.0
    %544 = vmatpush1.xpose.msra.mxu0 0.0
    %545 = vmatprep.subr.mxu0 0.0
    %546 = vmatpush1.xpose.msra.mxu0 0.0
    %547 = vmatprep.subr.mxu0 0.0
    %548 = vmatpush1.xpose.msra.mxu0 0.0
    %549 = vmatprep.subr.mxu0 0.0
    %550 = vmatpush1.xpose.msra.mxu0 0.0
    %551 = vmatprep.subr.mxu0 0.0
    %552 = vmatpush1.xpose.msra.mxu0 0.0
    %553 = vmatprep.subr.mxu0 0.0
    %554 = vmatpush1.xpose.msra.mxu0 0.0
    %555 = vmatprep.subr.mxu0 0.0
    %556 = vmatpush1.xpose.msra.mxu0 0.0
    %557 = vmatprep.subr.mxu0 0.0
    %558 = vmatpush1.xpose.msra.mxu0 0.0
    %559 = vmatprep.subr.mxu0 0.0
    %560 = vmatpush1.xpose.msra.mxu0 0.0
    %561 = vmatprep.subr.mxu0 0.0
    %562 = vmatpush1.xpose.msra.mxu0 0.0
    %563 = vmatprep.subr.mxu0 0.0
    %564 = vmatpush1.xpose.msra.mxu0 0.0
    %565 = vmatprep.subr.mxu0 0.0
    %566 = vmatpush1.xpose.msra.mxu0 0.0
    %567 = vmatprep.subr.mxu0 0.0
    %568 = vmatpush1.xpose.msra.mxu0 0.0
    %569 = vmatprep.subr.mxu0 0.0
    %570 = vmatpush1.xpose.msra.mxu0 0.0
    %571 = vmatprep.mubr.f32.mxu0 %v436
    %572 = vmatmul.mubr.f32.gmra.mrb[0].mxu0 %v435
    %v573 = vpop.f32.mrb[0].mxu0
    %v574 = vadd.f32 %v504, %v573
    %v575 = vpop.f32.mrb[0].mxu0
    %576 = vdwg.mxu0
    %vm577 = vcmask 122880
    %578 = vst.msk [vmem:[#allocation13] sm:$0x1] %vm577, %v574
    %vm579 = vcmask 130048
    %v581 = vsel %vm579, %v77, 0
    %583 = vmatprep.subr.mxu0 %v407
    %584 = vmatpush1.msra.mxu0 %v406
    %585 = vmatprep.subr.mxu0 %v411
    %586 = vmatpush1.msra.mxu0 %v410
    %587 = vmatprep.subr.mxu0 0.0
    %588 = vmatpush1.msra.mxu0 0.0
    %589 = vmatprep.subr.mxu0 0.0
    %590 = vmatpush1.msra.mxu0 0.0
    %591 = vmatprep.subr.mxu0 0.0
    %592 = vmatpush1.msra.mxu0 0.0
    %593 = vmatprep.subr.mxu0 0.0
    %594 = vmatpush1.msra.mxu0 0.0
    %595 = vmatprep.subr.mxu0 0.0
    %596 = vmatpush1.msra.mxu0 0.0
    %597 = vmatprep.subr.mxu0 0.0
    %598 = vmatpush1.msra.mxu0 0.0
    %599 = vmatprep.subr.mxu0 0.0
    %600 = vmatpush1.msra.mxu0 0.0
    %601 = vmatprep.subr.mxu0 0.0
    %602 = vmatpush1.msra.mxu0 0.0
    %603 = vmatprep.subr.mxu0 0.0
    %604 = vmatpush1.msra.mxu0 0.0
    %605 = vmatprep.subr.mxu0 0.0
    %606 = vmatpush1.msra.mxu0 0.0
    %607 = vmatprep.subr.mxu0 0.0
    %608 = vmatpush1.msra.mxu0 0.0
    %609 = vmatprep.subr.mxu0 0.0
    %610 = vmatpush1.msra.mxu0 0.0
    %611 = vmatprep.subr.mxu0 0.0
    %612 = vmatpush1.msra.mxu0 0.0
    %613 = vmatprep.subr.mxu0 0.0
    %614 = vmatpush1.msra.mxu0 0.0
    %615 = vmatprep.subr.mxu0 0.0
    %616 = vmatpush1.msra.mxu0 0.0
    %617 = vmatprep.subr.mxu0 0.0
    %618 = vmatpush1.msra.mxu0 0.0
    %619 = vmatprep.subr.mxu0 0.0
    %620 = vmatpush1.msra.mxu0 0.0
    %621 = vmatprep.subr.mxu0 0.0
    %622 = vmatpush1.msra.mxu0 0.0
    %623 = vmatprep.subr.mxu0 0.0
    %624 = vmatpush1.msra.mxu0 0.0
    %625 = vmatprep.subr.mxu0 0.0
    %626 = vmatpush1.msra.mxu0 0.0
    %627 = vmatprep.subr.mxu0 0.0
    %628 = vmatpush1.msra.mxu0 0.0
    %629 = vmatprep.subr.mxu0 0.0
    %630 = vmatpush1.msra.mxu0 0.0
    %631 = vmatprep.subr.mxu0 0.0
    %632 = vmatpush1.msra.mxu0 0.0
    %633 = vmatprep.subr.mxu0 0.0
    %634 = vmatpush1.msra.mxu0 0.0
    %635 = vmatprep.subr.mxu0 0.0
    %636 = vmatpush1.msra.mxu0 0.0
    %637 = vmatprep.subr.mxu0 0.0
    %638 = vmatpush1.msra.mxu0 0.0
    %639 = vmatprep.subr.mxu0 0.0
    %640 = vmatpush1.msra.mxu0 0.0
    %641 = vmatprep.subr.mxu0 0.0
    %642 = vmatpush1.msra.mxu0 0.0
    %643 = vmatprep.subr.mxu0 0.0
    %644 = vmatpush1.msra.mxu0 0.0
    %645 = vmatprep.subr.mxu0 0.0
    %646 = vmatpush1.msra.mxu0 0.0
    %647 = vmatprep.mubr.f32.mxu0 0.0
    %648 = vmatmul.mubr.f32.gmra.mrb[0].mxu0 %v581
    %v649 = vpop.f32.mrb[0].mxu0
    %v650 = vadd.f32 0.0, %v649
    %v651 = vpop.f32.mrb[0].mxu0
    %v652 = vadd.f32 0.0, %v651
    %653 = vdwg.mxu0
    %654 = vmatprep.subr.mxu0 %v409
    %655 = vmatpush1.msra.mxu0 %v408
    %656 = vmatprep.subr.mxu0 %v413
    %657 = vmatpush1.msra.mxu0 %v412
    %658 = vmatprep.subr.mxu0 0.0
    %659 = vmatpush1.msra.mxu0 0.0
    %660 = vmatprep.subr.mxu0 0.0
    %661 = vmatpush1.msra.mxu0 0.0
    %662 = vmatprep.subr.mxu0 0.0
    %663 = vmatpush1.msra.mxu0 0.0
    %664 = vmatprep.subr.mxu0 0.0
    %665 = vmatpush1.msra.mxu0 0.0
    %666 = vmatprep.subr.mxu0 0.0
    %667 = vmatpush1.msra.mxu0 0.0
    %668 = vmatprep.subr.mxu0 0.0
    %669 = vmatpush1.msra.mxu0 0.0
    %670 = vmatprep.subr.mxu0 0.0
    %671 = vmatpush1.msra.mxu0 0.0
    %672 = vmatprep.subr.mxu0 0.0
    %673 = vmatpush1.msra.mxu0 0.0
    %674 = vmatprep.subr.mxu0 0.0
    %675 = vmatpush1.msra.mxu0 0.0
    %676 = vmatprep.subr.mxu0 0.0
    %677 = vmatpush1.msra.mxu0 0.0
    %678 = vmatprep.subr.mxu0 0.0
    %679 = vmatpush1.msra.mxu0 0.0
    %680 = vmatprep.subr.mxu0 0.0
    %681 = vmatpush1.msra.mxu0 0.0
    %682 = vmatprep.subr.mxu0 0.0
    %683 = vmatpush1.msra.mxu0 0.0
    %684 = vmatprep.subr.mxu0 0.0
    %685 = vmatpush1.msra.mxu0 0.0
    %686 = vmatprep.subr.mxu0 0.0
    %687 = vmatpush1.msra.mxu0 0.0
    %688 = vmatprep.subr.mxu0 0.0
    %689 = vmatpush1.msra.mxu0 0.0
    %690 = vmatprep.subr.mxu0 0.0
    %691 = vmatpush1.msra.mxu0 0.0
    %692 = vmatprep.subr.mxu0 0.0
    %693 = vmatpush1.msra.mxu0 0.0
    %694 = vmatprep.subr.mxu0 0.0
    %695 = vmatpush1.msra.mxu0 0.0
    %696 = vmatprep.subr.mxu0 0.0
    %697 = vmatpush1.msra.mxu0 0.0
    %698 = vmatprep.subr.mxu0 0.0
    %699 = vmatpush1.msra.mxu0 0.0
    %700 = vmatprep.subr.mxu0 0.0
    %701 = vmatpush1.msra.mxu0 0.0
    %702 = vmatprep.subr.mxu0 0.0
    %703 = vmatpush1.msra.mxu0 0.0
    %704 = vmatprep.subr.mxu0 0.0
    %705 = vmatpush1.msra.mxu0 0.0
    %706 = vmatprep.subr.mxu0 0.0
    %707 = vmatpush1.msra.mxu0 0.0
    %708 = vmatprep.subr.mxu0 0.0
    %709 = vmatpush1.msra.mxu0 0.0
    %710 = vmatprep.subr.mxu0 0.0
    %711 = vmatpush1.msra.mxu0 0.0
    %712 = vmatprep.subr.mxu0 0.0
    %713 = vmatpush1.msra.mxu0 0.0
    %714 = vmatprep.subr.mxu0 0.0
    %715 = vmatpush1.msra.mxu0 0.0
    %716 = vmatprep.subr.mxu0 0.0
    %717 = vmatpush1.msra.mxu0 0.0
    %718 = vmatprep.mubr.f32.mxu0 0.0
    %719 = vmatmul.mubr.f32.gmra.mrb[0].mxu0 %v581
    %v720 = vpop.f32.mrb[0].mxu0
    %v721 = vadd.f32 0.0, %v720
    %v722 = vpop.f32.mrb[0].mxu0
    %v723 = vadd.f32 0.0, %v722
    %724 = vdwg.mxu0
    %v727 = vsub.f32 %v650, %v73
    %v728 = vsub.f32 %v652, %v82
    %v729 = vsub.f32 %v721, %v74
    %v730 = vsub.f32 %v723, %v83
    %v731 = vmul.f32 %v727, %v433
    %v732 = vmul.f32 %v728, %v434
    %v733 = vmul.f32 %v729, %v435
    %v734 = vmul.f32 %v730, %v436
    %v735 = vmul.f32 %v731, %v731
    %v736 = vmul.f32 %v732, %v732
    %v737 = vmul.f32 %v733, %v733
    %v738 = vmul.f32 %v734, %v734
    %v739 = vsel %vm91, %v735, 0.0
    %v740 = vsel %vm91, %v736, 0.0
    %v741 = vadd.f32 %v739, %v740
    %v742 = vsel %vm91, %v737, 0.0
    %v743 = vadd.f32 %v741, %v742
    %v744 = vsel %vm91, %v738, 0.0
    %v745 = vadd.f32 %v743, %v744
    %746 = vadd.xlane.f32.xlu0 %v745
    %v747 = vpop.xlane.xlu0 %746
    %v748 = vrot.slane %v747, 4
    %v749 = vadd.f32 %v747, %v748
    %v750 = vrot.slane %v749, 2
    %v751 = vadd.f32 %v749, %v750
    %v752 = vrot.slane %v751, 1
    %v753 = vadd.f32 %v751, %v752
    %s754 = vtos %v753
    %v755 = vstv %s754
    %vm756 = vcmask 0
    %757 = vst.msk [vmem:[#allocation11] sm:$0x1] %vm756, %v755
    // Predicated region
    $region34: #{tpu_custom_call.1} parent=1 // pred_check
      _
    $region35: #{tpu_custom_call.1} parent=1 // pred_check_branch
      %759 = sbr.rel (0) target = $region37
    $region36: #{tpu_custom_call.1} parent=1 // pred_region
      %s761 = ssub.s32 64, 64
      %762 = vsyncadd [#allocation4], %s761
      %s764 = sshll.u32 [#allocation10], 4
      %s765 = int_to_ptr.vmem [resolvable:$true] %s764
      %767 = dma.vmem_to_hbm [thread:$0]  %s765, 64, %s4, [#allocation4]
    $region37: #{tpu_custom_call.1} parent=1 // pred_fallthru
      _
    // Predicated region
    $region38: #{tpu_custom_call.1} parent=1 // pred_check
      _
    $region39: #{tpu_custom_call.1} parent=1 // pred_check_branch
      %769 = sbr.rel (0) target = $region41
    $region40: #{tpu_custom_call.1} parent=1 // pred_region
      %s771 = ssub.s32 16, 16
      %772 = vsyncadd [#allocation12], %s771
      %s774 = sshll.u32 [#allocation11], 4
      %s775 = int_to_ptr.vmem [resolvable:$true] %s774
      %777 = dma.vmem_to_hbm [thread:$0]  %s775, 16, %s5, [#allocation12]
    $region41: #{tpu_custom_call.1} parent=1 // pred_fallthru
      _
    // Predicated region
    $region42: #{tpu_custom_call.1} parent=1 // pred_check
      _
    $region43: #{tpu_custom_call.1} parent=1 // pred_check_branch
      %779 = sbr.rel (0) target = $region45
    $region44: #{tpu_custom_call.1} parent=1 // pred_region
      %s781 = ssub.s32 16, 16
      %782 = vsyncadd [#allocation12], %s781
      %s784 = sshll.u32 [#allocation13], 4
      %s785 = int_to_ptr.vmem [resolvable:$true] %s784
      %787 = dma.vmem_to_hbm [thread:$0]  %s785, 16, %s6, [#allocation12]
    $region45: #{tpu_custom_call.1} parent=1 // pred_fallthru
      _
    // Predicated region
    $region46: #{tpu_custom_call.1} parent=1 // pred_check
      _
    $region47: #{tpu_custom_call.1} parent=1 // pred_check_branch
      %789 = sbr.rel (0) target = $region49
    $region48: #{tpu_custom_call.1} parent=1 // pred_region
      %790 = dma.done [#allocation4], 64
    $region49: #{tpu_custom_call.1} parent=1 // pred_fallthru
      _
    // Predicated region
    $region50: #{tpu_custom_call.1} parent=1 // pred_check
      _
    $region51: #{tpu_custom_call.1} parent=1 // pred_check_branch
      %792 = sbr.rel (0) target = $region53
    $region52: #{tpu_custom_call.1} parent=1 // pred_region
      %793 = dma.done [#allocation12], 16
    $region53: #{tpu_custom_call.1} parent=1 // pred_fallthru
      _
    // Predicated region
    $region54: #{tpu_custom_call.1} parent=1 // pred_check
      _
    $region55: #{tpu_custom_call.1} parent=1 // pred_check_branch
      %795 = sbr.rel (0) target = $region57
    $region56: #{tpu_custom_call.1} parent=1 // pred_region
      %796 = dma.done [#allocation12], 16
    $region57: #{tpu_custom_call.1} parent=1 // pred_fallthru
      _
    %797 = vsyncpa [#allocation3], 1
    %798 = vsyncpa [#allocation6], 1
    %799 = vsyncpa [#allocation9], 1
    %800 = vsyncpa [#allocation4], 1
    %801 = vsyncpa [#allocation12], 1

</llo_original>
